<compile_context>
chip_gen: v7x
topology: tpu7x:2x2x1
jax: 0.10.0
libtpu: 0.0.40
codegen_flags: <defaults>
</compile_context>

<pallas_src>
import jax
import jax.numpy as jnp
from jax.experimental import pallas as pl
from jax.experimental.pallas import tpu as pltpu

NEG_INF = -1e30          # bias value on padded action lanes
HIDDEN_PAD = 128         # 50 -> 128 (lane-dense)
ACTION_PAD = 128         # 4  -> 128 (lane-dense)


def policy_kernel(idx_ref, gumbel_ref, x_ref, w1_ref, b1_ref, w2_ref, b2_ref,
                  action_ref, logp_sel_ref):
    # ---- MLP: Linear -> ReLU -> Linear (bf16 MXU, f32 accumulation) ----
    x = x_ref[...].astype(jnp.bfloat16)
    h = jnp.dot(x, w1_ref[...], preferred_element_type=jnp.float32)
    h = jnp.maximum(h + b1_ref[...], 0.0)                    # ReLU, f32
    logits = jnp.dot(h.astype(jnp.bfloat16), w2_ref[...],
                     preferred_element_type=jnp.float32)
    logits = logits + b2_ref[...]          # padded action lanes get -1e30 here

    # ---- Categorical(logits=...): log-softmax normalization (f32) ----
    m = jnp.max(logits, axis=-1, keepdims=True)
    e = jnp.exp(logits - m)                # padded lanes -> exp(-1e30) = 0
    lse = jnp.log(jnp.sum(e, axis=-1, keepdims=True)) + m
    logp = logits - lse                    # (B, ACTION_PAD) f32, <= 0

    # ---- dist.log_prob(action_indices): one-hot gather along lanes ----
    lane = jax.lax.broadcasted_iota(jnp.int32, logp.shape, 1)
    onehot = (lane == idx_ref[...]).astype(jnp.float32)       # (B, A_pad)
    logp_sel_ref[...] = jnp.sum(logp * onehot, axis=-1, keepdims=True)

    # ---- dist.sample(): Gumbel-max (noise tile supplied as an input) ----
    z = logp + gumbel_ref[...]             # padded lanes stay ~ -1e30: never win
    zmax = jnp.max(z, axis=-1, keepdims=True)
    cand = jnp.where(z == zmax, lane.astype(jnp.float32), jnp.float32(1e9))
    action_ref[...] = jnp.min(cand, axis=-1, keepdims=True).astype(jnp.int32)


def policy_forward(params, x, rng_key, action_indices=None, get_logprob=False):
    """Mirrors PolicyNetwork.forward.

    Returns sampled actions (int32, shape (B,)) when get_logprob=False,
    else log-probabilities of `action_indices` (float32, shape (B,)).
    Sampling is Gumbel-max over the normalized logits (same distribution as
    torch's Categorical.sample(); the RNG bitstream differs)."""
    w1, b1, w2, b2 = params
    B = x.shape[0]

    if action_indices is None:
        idx = jnp.zeros((B, 1), jnp.int32)
    else:
        idx = action_indices.astype(jnp.int32).reshape(B, 1)

    # Tiny (B, 128) noise tile; generated outside the kernel so the same code
    # runs on real TPU and in interpret mode.
    gumbel = jax.random.gumbel(rng_key, (B, ACTION_PAD), jnp.float32)

    vmem = pl.BlockSpec(memory_space=pltpu.MemorySpace.VMEM)

    action, logp_sel = pl.pallas_call(
        policy_kernel,
        out_shape=(
            jax.ShapeDtypeStruct((B, 1), jnp.int32),     # sampled action
            jax.ShapeDtypeStruct((B, 1), jnp.float32),   # log_prob(action_indices)
        ),
        in_specs=[vmem, vmem, vmem, vmem, vmem, vmem, vmem],
        out_specs=(vmem, vmem),
    )(idx, gumbel, x, w1, b1, w2, b2)

    if get_logprob:
        return logp_sel[:, 0]
    return action[:, 0]


def init_params(key, state_dim, hidden, action_dim,
                hidden_pad=HIDDEN_PAD, action_pad=ACTION_PAD):
    """torch.nn.Linear-style init (uniform +-1/sqrt(fan_in)), padded to
    lane-dense tiles.  Weights stored bf16 (in, out); biases f32 (1, out).
    Padded hidden columns/rows are zero; padded action biases are -1e30 so the
    log-softmax / sampler never see phantom actions."""
    k1, k2, k3, k4 = jax.random.split(key, 4)
    lim1 = 1.0 / jnp.sqrt(jnp.float32(state_dim))
    lim2 = 1.0 / jnp.sqrt(jnp.float32(hidden))
    w1 = jax.random.uniform(k1, (state_dim, hidden), jnp.float32, -lim1, lim1)
    b1 = jax.random.uniform(k2, (hidden,), jnp.float32, -lim1, lim1)
    w2 = jax.random.uniform(k3, (hidden, action_dim), jnp.float32, -lim2, lim2)
    b2 = jax.random.uniform(k4, (action_dim,), jnp.float32, -lim2, lim2)

    w1p = (jnp.zeros((state_dim, hidden_pad), jnp.float32)
           .at[:, :hidden].set(w1).astype(jnp.bfloat16))
    b1p = jnp.zeros((1, hidden_pad), jnp.float32).at[0, :hidden].set(b1)
    w2p = (jnp.zeros((hidden_pad, action_pad), jnp.float32)
           .at[:hidden, :action_dim].set(w2).astype(jnp.bfloat16))
    b2p = (jnp.full((1, action_pad), NEG_INF, jnp.float32)
           .at[0, :action_dim].set(b2))
    return (w1p, b1p, w2p, b2p)


def _ref_logp(params, x):
    """Pure-JAX reference of the normalized log-probs (same bf16/f32 recipe)."""
    w1, b1, w2, b2 = params
    h = jnp.maximum(jnp.dot(x.astype(jnp.bfloat16), w1,
                            preferred_element_type=jnp.float32) + b1, 0.0)
    logits = jnp.dot(h.astype(jnp.bfloat16), w2,
                     preferred_element_type=jnp.float32) + b2
    return jax.nn.log_softmax(logits, axis=-1)


if __name__ == "__main__":
    # Shapes consistent with the module: state_dim=16, hidden_layers=[50], action_dim=4.
    B, STATE_DIM, HIDDEN, ACTION_DIM = 8, 16, 50, 4

    root = jax.random.PRNGKey(0)
    k_param, k_x, k_act, k_sample = jax.random.split(root, 4)

    params = init_params(k_param, STATE_DIM, HIDDEN, ACTION_DIM)
    x = jax.random.normal(k_x, (B, STATE_DIM), jnp.float32)

    # Path 1: forward(x) -> sampled actions (single fused pallas_call)
    actions = policy_forward(params, x, rng_key=k_sample)
    actions = jax.block_until_ready(actions)

    # Path 2: forward(x, action_indices, get_logprob=True) -> log-probs
    action_indices = jax.random.randint(k_act, (B,), 0, ACTION_DIM)
    logprobs = policy_forward(params, x, rng_key=k_sample,
                              action_indices=action_indices, get_logprob=True)
    logprobs = jax.block_until_ready(logprobs)

    assert actions.shape == (B,) and actions.dtype == jnp.int32
    assert bool(jnp.all((actions >= 0) & (actions < ACTION_DIM)))
    assert logprobs.shape == (B,)
    assert bool(jnp.all(logprobs <= 0.0))

    # Numerical check of the log_prob path against a pure-JAX reference.
    ref = jnp.take_along_axis(_ref_logp(params, x),
                              action_indices.astype(jnp.int32)[:, None],
                              axis=-1)[:, 0]
    assert float(jnp.max(jnp.abs(logprobs - ref))) < 5e-2

    # Sampling check against the same Gumbel noise applied to the reference
    # log-probs (Gumbel-max argmax must agree).
    g = jax.random.gumbel(k_sample, (B, ACTION_PAD), jnp.float32)[:, :ACTION_DIM]
    ref_actions = jnp.argmax(_ref_logp(params, x)[:, :ACTION_DIM] + g, axis=-1)
    assert bool(jnp.all(actions == ref_actions.astype(jnp.int32)))

    print("KERNEL_OK")
</pallas_src>

<mosaic_0001>
module attributes {stable_mosaic.version = 11 : i64} {
  func.func @policy_kernel(%arg0: memref<8x1xi32, #tpu.memory_space<vmem>>, %arg1: memref<8x128xf32, #tpu.memory_space<vmem>>, %arg2: memref<8x16xf32, #tpu.memory_space<vmem>>, %arg3: memref<16x128xbf16, #tpu.memory_space<vmem>>, %arg4: memref<1x128xf32, #tpu.memory_space<vmem>>, %arg5: memref<128x128xbf16, #tpu.memory_space<vmem>>, %arg6: memref<1x128xf32, #tpu.memory_space<vmem>>, %arg7: memref<8x1xi32, #tpu.memory_space<vmem>>, %arg8: memref<8x1xf32, #tpu.memory_space<vmem>>) attributes {dimension_semantics = [], scalar_prefetch = 0 : i64, scratch_operands = 0 : i64, tpu.core_type = #tpu.core_type<tc>} {
    %c0 = arith.constant 0 : index
    %c0_0 = arith.constant 0 : index
    %0 = vector.load %arg2[%c0, %c0_0] : memref<8x16xf32, #tpu.memory_space<vmem>>, vector<8x16xf32>
    %1 = arith.truncf %0 : vector<8x16xf32> to vector<8x16xbf16>
    %c0_1 = arith.constant 0 : index
    %c0_2 = arith.constant 0 : index
    %2 = vector.load %arg3[%c0_1, %c0_2] : memref<16x128xbf16, #tpu.memory_space<vmem>>, vector<16x128xbf16>
    %cst = arith.constant dense<0.000000e+00> : vector<8x128xf32>
    %3 = tpu.matmul %1, %2, %cst {dimension_numbers = #tpu.dot_dimension_numbers<[1], [0], [0], [1], [0, 0, 1, 1], [], []>} : vector<8x16xbf16>, vector<16x128xbf16>, vector<8x128xf32> -> vector<8x128xf32>
    %c0_3 = arith.constant 0 : index
    %c0_4 = arith.constant 0 : index
    %4 = vector.load %arg4[%c0_3, %c0_4] : memref<1x128xf32, #tpu.memory_space<vmem>>, vector<1x128xf32>
    %5 = vector.broadcast %4 : vector<1x128xf32> to vector<8x128xf32>
    %6 = arith.addf %3, %5 : vector<8x128xf32>
    %cst_5 = arith.constant 0.000000e+00 : f32
    %7 = vector.broadcast %cst_5 : f32 to vector<8x128xf32>
    %8 = arith.maximumf %6, %7 : vector<8x128xf32>
    %9 = arith.truncf %8 : vector<8x128xf32> to vector<8x128xbf16>
    %c0_6 = arith.constant 0 : index
    %c0_7 = arith.constant 0 : index
    %10 = vector.load %arg5[%c0_6, %c0_7] : memref<128x128xbf16, #tpu.memory_space<vmem>>, vector<128x128xbf16>
    %cst_8 = arith.constant dense<0.000000e+00> : vector<8x128xf32>
    %11 = tpu.matmul %9, %10, %cst_8 {dimension_numbers = #tpu.dot_dimension_numbers<[1], [0], [0], [1], [0, 0, 1, 1], [], []>} : vector<8x128xbf16>, vector<128x128xbf16>, vector<8x128xf32> -> vector<8x128xf32>
    %c0_9 = arith.constant 0 : index
    %c0_10 = arith.constant 0 : index
    %12 = vector.load %arg6[%c0_9, %c0_10] : memref<1x128xf32, #tpu.memory_space<vmem>>, vector<1x128xf32>
    %13 = vector.broadcast %12 : vector<1x128xf32> to vector<8x128xf32>
    %14 = arith.addf %11, %13 : vector<8x128xf32>
    %cst_11 = arith.constant dense<0xFF800000> : vector<8xf32>
    %15 = vector.multi_reduction <maximumf>, %14, %cst_11 [1] : vector<8x128xf32> to vector<8xf32>
    %16 = vector.shape_cast %15 : vector<8xf32> to vector<8x1xf32>
    %17 = vector.broadcast %16 : vector<8x1xf32> to vector<8x128xf32>
    %18 = arith.subf %14, %17 : vector<8x128xf32>
    %19 = math.exp %18 : vector<8x128xf32>
    %cst_12 = arith.constant dense<0.000000e+00> : vector<8xf32>
    %20 = vector.multi_reduction <add>, %19, %cst_12 [1] : vector<8x128xf32> to vector<8xf32>
    %21 = vector.shape_cast %20 : vector<8xf32> to vector<8x1xf32>
    %22 = math.log %21 : vector<8x1xf32>
    %23 = arith.addf %22, %16 : vector<8x1xf32>
    %24 = vector.broadcast %23 : vector<8x1xf32> to vector<8x128xf32>
    %25 = arith.subf %14, %24 : vector<8x128xf32>
    %26 = tpu.iota {dimensions = array<i32: 1>} : vector<8x128xi32>
    %c0_13 = arith.constant 0 : index
    %c0_14 = arith.constant 0 : index
    %27 = vector.load %arg0[%c0_13, %c0_14] : memref<8x1xi32, #tpu.memory_space<vmem>>, vector<8x1xi32>
    %28 = vector.broadcast %27 : vector<8x1xi32> to vector<8x128xi32>
    %29 = arith.cmpi eq, %26, %28 : vector<8x128xi32>
    %30 = arith.extui %29 : vector<8x128xi1> to vector<8x128xi32>
    %31 = arith.sitofp %30 : vector<8x128xi32> to vector<8x128xf32>
    %32 = arith.mulf %25, %31 : vector<8x128xf32>
    %cst_15 = arith.constant dense<0.000000e+00> : vector<8xf32>
    %33 = vector.multi_reduction <add>, %32, %cst_15 [1] : vector<8x128xf32> to vector<8xf32>
    %34 = vector.shape_cast %33 : vector<8xf32> to vector<8x1xf32>
    %c0_16 = arith.constant 0 : index
    %c0_17 = arith.constant 0 : index
    %35 = vector.load %arg8[%c0_16, %c0_17] : memref<8x1xf32, #tpu.memory_space<vmem>>, vector<8x1xf32>
    tpu.vector_store %arg8[%c0_16, %c0_17], %34 {strides = array<i32>} : memref<8x1xf32, #tpu.memory_space<vmem>>, vector<8x1xf32>,
    %c0_18 = arith.constant 0 : index
    %c0_19 = arith.constant 0 : index
    %36 = vector.load %arg1[%c0_18, %c0_19] : memref<8x128xf32, #tpu.memory_space<vmem>>, vector<8x128xf32>
    %37 = arith.addf %25, %36 : vector<8x128xf32>
    %cst_20 = arith.constant dense<0xFF800000> : vector<8xf32>
    %38 = vector.multi_reduction <maximumf>, %37, %cst_20 [1] : vector<8x128xf32> to vector<8xf32>
    %39 = vector.shape_cast %38 : vector<8xf32> to vector<8x1xf32>
    %40 = vector.broadcast %39 : vector<8x1xf32> to vector<8x128xf32>
    %41 = arith.cmpf oeq, %37, %40 : vector<8x128xf32>
    %42 = arith.sitofp %26 : vector<8x128xi32> to vector<8x128xf32>
    %cst_21 = arith.constant 1.000000e+09 : f32
    %43 = vector.broadcast %cst_21 : f32 to vector<8x128xf32>
    %44 = arith.select %41, %42, %43 : vector<8x128xi1>, vector<8x128xf32>
    %cst_22 = arith.constant dense<0x7F800000> : vector<8xf32>
    %45 = vector.multi_reduction <minimumf>, %44, %cst_22 [1] : vector<8x128xf32> to vector<8xf32>
    %46 = vector.shape_cast %45 : vector<8xf32> to vector<8x1xf32>
    %47 = arith.fptosi %46 : vector<8x1xf32> to vector<8x1xi32>
    %c0_23 = arith.constant 0 : index
    %c0_24 = arith.constant 0 : index
    %48 = vector.load %arg7[%c0_23, %c0_24] : memref<8x1xi32, #tpu.memory_space<vmem>>, vector<8x1xi32>
    tpu.vector_store %arg7[%c0_23, %c0_24], %47 {strides = array<i32>} : memref<8x1xi32, #tpu.memory_space<vmem>>, vector<8x1xi32>,
    return
  }
}

</mosaic_0001>

<llo_original>
// kernel: tpu_custom_call.1
$region0: #{tpu_custom_call.1}
  #allocation0 [shape = 'u32[]', space=smem, size = 0x4, offset = 0x4, fixed_abs, tag = 'smem constant byte address 0x4 - core index']
  #allocation1 [shape = 'u32[144,128]{1,0:T(1,128)}', space=vmem, size = 0x12000, scoped, tag = 'internal scratch']
  %s0 = inlined_call_operand.vmem [shape: s32[8,1], index: 0, kind: input, shape index: {}]
  %s1 = inlined_call_operand.vmem [shape: f32[8,128], index: 1, kind: input, shape index: {}]
  %s2 = inlined_call_operand.vmem [shape: f32[8,16], index: 2, kind: input, shape index: {}]
  %s3 = inlined_call_operand.hbm [shape: bf16[16,128], index: 3, kind: input, shape index: {}]
  %s4 = inlined_call_operand.vmem [shape: f32[1,128], index: 4, kind: input, shape index: {}]
  %s5 = inlined_call_operand.hbm [shape: bf16[128,128], index: 5, kind: input, shape index: {}]
  %s6 = inlined_call_operand.vmem [shape: f32[1,128], index: 6, kind: input, shape index: {}]
  %s7 = inlined_call_operand.vmem [shape: s32[8,1], index: 7, kind: output, shape index: {0}]
  %s8 = inlined_call_operand.vmem [shape: f32[8,1], index: 8, kind: output, shape index: {1}]
  %9 = xla_tuple %s7, %s8
  %s10 = sld [smem:[#allocation0]]
  $region54: #{tpu_custom_call.1} parent=0
    _
  %s12 = ssub.s32 1, %s10
  %s13 = scalar_select 0, %s12, %s10
  $region1: #{tpu_custom_call.1} parent=0
    #allocation2 [shape = 'u8[4096]{0}', space=vmem, size = 0x1000, scoped, tag = 'input window, operand 3, single buffered']
    #allocation3 [shape = 's32[1]{0}', space=sflag, size = 0x4, scoped, tag = 'scoped memory for tpu_custom_call.1']
    #allocation4 [shape = 'u8[32768]{0}', space=vmem, size = 0x8000, scoped, tag = 'input window, operand 5, single buffered']
    #allocation5 [shape = 's32[1]{0}', space=sflag, size = 0x4, scoped, tag = 'scoped memory for tpu_custom_call.1']
    %14 = vsyncpa [#allocation3], 0
    %15 = vsyncpa [#allocation5], 0
    // Predicated region
    $region2: #{tpu_custom_call.1} parent=1 // pred_check
      _
    $region3: #{tpu_custom_call.1} parent=1 // pred_check_branch
      %17 = sbr.rel (0) target = $region5
    $region4: #{tpu_custom_call.1} parent=1 // pred_region
      _
    $region5: #{tpu_custom_call.1} parent=1 // pred_fallthru
      _
    // Predicated region
    $region6: #{tpu_custom_call.1} parent=1 // pred_check
      _
    $region7: #{tpu_custom_call.1} parent=1 // pred_check_branch
      %19 = sbr.rel (0) target = $region9
    $region8: #{tpu_custom_call.1} parent=1 // pred_region
      _
    $region9: #{tpu_custom_call.1} parent=1 // pred_fallthru
      _
    // Predicated region
    $region10: #{tpu_custom_call.1} parent=1 // pred_check
      _
    $region11: #{tpu_custom_call.1} parent=1 // pred_check_branch
      %21 = sbr.rel (0) target = $region13
    $region12: #{tpu_custom_call.1} parent=1 // pred_region
      _
    $region13: #{tpu_custom_call.1} parent=1 // pred_fallthru
      _
    // Predicated region
    $region14: #{tpu_custom_call.1} parent=1 // pred_check
      _
    $region15: #{tpu_custom_call.1} parent=1 // pred_check_branch
      %23 = sbr.rel (0) target = $region17
    $region16: #{tpu_custom_call.1} parent=1 // pred_region
      %s25 = ssub.s32 128, 128
      %26 = vsyncadd [#allocation3], %s25
      %s27 = sshll.u32 [#allocation2], 4
      %s28 = int_to_ptr.vmem [resolvable:$true] %s27
      %33 = dma.hbm_to_vmem [thread:$0]  %s3, 128, %s28, [#allocation3], 64, 64, 4
    $region17: #{tpu_custom_call.1} parent=1 // pred_fallthru
      _
    // Predicated region
    $region18: #{tpu_custom_call.1} parent=1 // pred_check
      _
    $region19: #{tpu_custom_call.1} parent=1 // pred_check_branch
      %35 = sbr.rel (0) target = $region21
    $region20: #{tpu_custom_call.1} parent=1 // pred_region
      _
    $region21: #{tpu_custom_call.1} parent=1 // pred_fallthru
      _
    // Predicated region
    $region22: #{tpu_custom_call.1} parent=1 // pred_check
      _
    $region23: #{tpu_custom_call.1} parent=1 // pred_check_branch
      %37 = sbr.rel (0) target = $region25
    $region24: #{tpu_custom_call.1} parent=1 // pred_region
      %s39 = ssub.s32 1024, 1024
      %40 = vsyncadd [#allocation5], %s39
      %s41 = sshll.u32 [#allocation4], 4
      %s42 = int_to_ptr.vmem [resolvable:$true] %s41
      %47 = dma.hbm_to_vmem [thread:$0]  %s5, 1024, %s42, [#allocation5], 64, 64, 4
    $region25: #{tpu_custom_call.1} parent=1 // pred_fallthru
      _
    // Predicated region
    $region26: #{tpu_custom_call.1} parent=1 // pred_check
      _
    $region27: #{tpu_custom_call.1} parent=1 // pred_check_branch
      %49 = sbr.rel (0) target = $region29
    $region28: #{tpu_custom_call.1} parent=1 // pred_region
      _
    $region29: #{tpu_custom_call.1} parent=1 // pred_fallthru
      _
    // Predicated region
    $region30: #{tpu_custom_call.1} parent=1 // pred_check
      _
    $region31: #{tpu_custom_call.1} parent=1 // pred_check_branch
      %51 = sbr.rel (0) target = $region33
    $region32: #{tpu_custom_call.1} parent=1 // pred_region
      %52 = dma.done [#allocation3], 128
    $region33: #{tpu_custom_call.1} parent=1 // pred_fallthru
      _
    // Predicated region
    $region34: #{tpu_custom_call.1} parent=1 // pred_check
      _
    $region35: #{tpu_custom_call.1} parent=1 // pred_check_branch
      %54 = sbr.rel (0) target = $region37
    $region36: #{tpu_custom_call.1} parent=1 // pred_region
      %55 = dma.done [#allocation5], 1024
    $region37: #{tpu_custom_call.1} parent=1 // pred_fallthru
      _
    %v57 = vld [vmem:[%s2] sm:$0xff]
    %v58 = vpack.c.bf16 %v57, %v57
    %v59 = vld [vmem:[#allocation2] sm:$0xf]
    %v60 = vld [vmem:[#allocation2 + $0x4] sm:$0xf]
    %v61 = vld [vmem:[%s4] sm:$0x1]
    %v63 = vlaneseq
    %v64 = vshrl.u32 %v63, 7
    %v65 = vsub.s32 0, %v64
    %v66 = vrot.slane %v61, %v65
    %v70 = vunpack.c.l.b16 %v59
    %v71 = vunpack.c.l.b16 %v60
    %v72 = vpack.c.b16 %v71, %v70
    %vm74 = vcmask 130048
    %v76 = vsel %vm74, %v58, 0
    %78 = vmatprep.subr.bf16.mxu0 0
    %79 = vmatpush1.bf16.msra.mxu0 %v72
    %80 = vmatprep.subr.bf16.mxu0 0
    %81 = vmatpush1.bf16.msra.mxu0 0
    %82 = vmatprep.subr.bf16.mxu0 0
    %83 = vmatpush1.bf16.msra.mxu0 0
    %84 = vmatprep.subr.bf16.mxu0 0
    %85 = vmatpush1.bf16.msra.mxu0 0
    %86 = vmatprep.subr.bf16.mxu0 0
    %87 = vmatpush1.bf16.msra.mxu0 0
    %88 = vmatprep.subr.bf16.mxu0 0
    %89 = vmatpush1.bf16.msra.mxu0 0
    %90 = vmatprep.subr.bf16.mxu0 0
    %91 = vmatpush1.bf16.msra.mxu0 0
    %92 = vmatprep.subr.bf16.mxu0 0
    %93 = vmatpush1.bf16.msra.mxu0 0
    %94 = vmatprep.subr.bf16.mxu0 0
    %95 = vmatpush1.bf16.msra.mxu0 0
    %96 = vmatprep.subr.bf16.mxu0 0
    %97 = vmatpush1.bf16.msra.mxu0 0
    %98 = vmatprep.subr.bf16.mxu0 0
    %99 = vmatpush1.bf16.msra.mxu0 0
    %100 = vmatprep.subr.bf16.mxu0 0
    %101 = vmatpush1.bf16.msra.mxu0 0
    %102 = vmatprep.subr.bf16.mxu0 0
    %103 = vmatpush1.bf16.msra.mxu0 0
    %104 = vmatprep.subr.bf16.mxu0 0
    %105 = vmatpush1.bf16.msra.mxu0 0
    %106 = vmatprep.subr.bf16.mxu0 0
    %107 = vmatpush1.bf16.msra.mxu0 0
    %108 = vmatprep.subr.bf16.mxu0 0
    %109 = vmatpush1.bf16.msra.mxu0 0
    %110 = vmatprep.mubr.bf16.mxu0 0
    %111 = vmatmul.mubr.bf16.gmra.mrb[0].mxu0 %v76
    %v112 = vpop.f32.mrb[0].mxu0
    %v113 = vadd.f32 %v66, %v112
    %v114 = vpop.f32.mrb[0].mxu0
    %v115 = vpop.f32.mrb[0].mxu0
    %v116 = vpop.f32.mrb[0].mxu0
    %117 = vdwg.mxu0
    %v118 = vmax.f32 %v113, 0.0
    %v119 = vpack.c.bf16 %v118, %v118
    %v120 = vld [vmem:[#allocation4] sm:$0xf]
    %v121 = vld [vmem:[#allocation4 + $0x4] sm:$0xf]
    %v122 = vld [vmem:[#allocation4 + $0x8] sm:$0xf]
    %v123 = vld [vmem:[#allocation4 + $0xc] sm:$0xf]
    %v124 = vld [vmem:[#allocation4 + $0x10] sm:$0xf]
    %v125 = vld [vmem:[#allocation4 + $0x14] sm:$0xf]
    %v126 = vld [vmem:[#allocation4 + $0x18] sm:$0xf]
    %v127 = vld [vmem:[#allocation4 + $0x1c] sm:$0xf]
    %v128 = vld [vmem:[#allocation4 + $0x20] sm:$0xf]
    %v129 = vld [vmem:[#allocation4 + $0x24] sm:$0xf]
    %v130 = vld [vmem:[#allocation4 + $0x28] sm:$0xf]
    %v131 = vld [vmem:[#allocation4 + $0x2c] sm:$0xf]
    %v132 = vld [vmem:[#allocation4 + $0x30] sm:$0xf]
    %v133 = vld [vmem:[#allocation4 + $0x34] sm:$0xf]
    %v134 = vld [vmem:[#allocation4 + $0x38] sm:$0xf]
    %v135 = vld [vmem:[#allocation4 + $0x3c] sm:$0xf]
    %v136 = vld [vmem:[%s6] sm:$0x1]
    %v138 = vlaneseq
    %v139 = vshrl.u32 %v138, 7
    %v140 = vsub.s32 0, %v139
    %v141 = vrot.slane %v136, %v140
    %v159 = vunpack.c.l.b16 %v120
    %v160 = vunpack.c.l.b16 %v121
    %v161 = vunpack.c.l.b16 %v122
    %v162 = vunpack.c.l.b16 %v123
    %v163 = vunpack.c.l.b16 %v124
    %v164 = vunpack.c.l.b16 %v125
    %v165 = vunpack.c.l.b16 %v126
    %v166 = vunpack.c.l.b16 %v127
    %v167 = vunpack.c.l.b16 %v128
    %v168 = vunpack.c.l.b16 %v129
    %v169 = vunpack.c.l.b16 %v130
    %v170 = vunpack.c.l.b16 %v131
    %v171 = vunpack.c.l.b16 %v132
    %v172 = vunpack.c.l.b16 %v133
    %v173 = vunpack.c.l.b16 %v134
    %v174 = vunpack.c.l.b16 %v135
    %v175 = vpack.c.b16 %v160, %v159
    %v176 = vpack.c.b16 %v162, %v161
    %v177 = vpack.c.b16 %v164, %v163
    %v178 = vpack.c.b16 %v166, %v165
    %v179 = vpack.c.b16 %v168, %v167
    %v180 = vpack.c.b16 %v170, %v169
    %v181 = vpack.c.b16 %v172, %v171
    %v182 = vpack.c.b16 %v174, %v173
    %191 = vmatprep.subr.bf16.mxu0 0
    %192 = vmatpush1.bf16.msra.mxu0 %v175
    %193 = vmatprep.subr.bf16.mxu0 0
    %194 = vmatpush1.bf16.msra.mxu0 %v176
    %195 = vmatprep.subr.bf16.mxu0 0
    %196 = vmatpush1.bf16.msra.mxu0 %v177
    %197 = vmatprep.subr.bf16.mxu0 0
    %198 = vmatpush1.bf16.msra.mxu0 %v178
    %199 = vmatprep.subr.bf16.mxu0 0
    %200 = vmatpush1.bf16.msra.mxu0 %v179
    %201 = vmatprep.subr.bf16.mxu0 0
    %202 = vmatpush1.bf16.msra.mxu0 %v180
    %203 = vmatprep.subr.bf16.mxu0 0
    %204 = vmatpush1.bf16.msra.mxu0 %v181
    %205 = vmatprep.subr.bf16.mxu0 0
    %206 = vmatpush1.bf16.msra.mxu0 %v182
    %207 = vmatprep.subr.bf16.mxu0 0
    %208 = vmatpush1.bf16.msra.mxu0 0
    %209 = vmatprep.subr.bf16.mxu0 0
    %210 = vmatpush1.bf16.msra.mxu0 0
    %211 = vmatprep.subr.bf16.mxu0 0
    %212 = vmatpush1.bf16.msra.mxu0 0
    %213 = vmatprep.subr.bf16.mxu0 0
    %214 = vmatpush1.bf16.msra.mxu0 0
    %215 = vmatprep.subr.bf16.mxu0 0
    %216 = vmatpush1.bf16.msra.mxu0 0
    %217 = vmatprep.subr.bf16.mxu0 0
    %218 = vmatpush1.bf16.msra.mxu0 0
    %219 = vmatprep.subr.bf16.mxu0 0
    %220 = vmatpush1.bf16.msra.mxu0 0
    %221 = vmatprep.subr.bf16.mxu0 0
    %222 = vmatpush1.bf16.msra.mxu0 0
    %223 = vmatprep.mubr.bf16.mxu0 0
    %224 = vmatmul.mubr.bf16.gmra.mrb[0].mxu0 %v119
    %v225 = vpop.f32.mrb[0].mxu0
    %v226 = vadd.f32 %v141, %v225
    %v227 = vpop.f32.mrb[0].mxu0
    %v228 = vpop.f32.mrb[0].mxu0
    %v229 = vpop.f32.mrb[0].mxu0
    %230 = vdwg.mxu0
    %231 = vmax.xlane.f32.xlu0 %v226
    %v232 = vpop.xlane.xlu0 %231
    %v233 = vsub.f32 %v226, %v232
    %v234 = vmul.f32 %v233, 1.442695
    %v235 = vpow.pop %v234
    %236 = vadd.xlane.f32.xlu0 %v235
    %v237 = vpop.xlane.xlu0 %236
    %v238 = vlog2.pop %v237
    %v239 = vmul.f32 %v238, 0.6931472
    %v240 = vadd.f32 %v239, %v232
    %v241 = vsub.f32 %v226, %v240
    %v242 = vlaneseq
    %v243 = vand.u32 %v242, 127
    %v244 = vld [vmem:[%s0] sm:$0xff]
    %245 = vset.pattern.permute.xlu0 0
    %246 = vperm.xlu0 %245, %v244
    %v247 = vpop.permute.xlu0 %246
    %vm248 = vcmp.eq.s32.totalorder %v243, %v247
    %v249 = vsel %vm248, 1, 0
    %v250 = vcvt.s32.f32 %v249
    %v251 = vmul.f32 %v241, %v250
    %252 = vadd.xlane.f32.xlu0 %v251
    %v253 = vpop.xlane.xlu0 %252
    %vm254 = vcmask 7168
    %255 = vst.msk [vmem:[%s8] sm:$0xff] %vm254, %v253
    %v256 = vld [vmem:[%s1] sm:$0xff]
    %v257 = vadd.f32 %v241, %v256
    %258 = vmax.xlane.f32.xlu0 %v257
    %v259 = vpop.xlane.xlu0 %258
    %vm260 = vcmp.eq.f32.partialorder %v257, %v259
    %v261 = vcvt.s32.f32 %v243
    %v262 = vsel %vm260, %v261, 1e+09
    %263 = vmin.xlane.f32.xlu0 %v262
    %v264 = vpop.xlane.xlu0 %263
    %v265 = vcvt.f32.s32.to.zero.pseudo %v264
    %266 = vst.msk [vmem:[%s7] sm:$0xff] %vm254, %v265
    // Predicated region
    $region38: #{tpu_custom_call.1} parent=1 // pred_check
      _
    $region39: #{tpu_custom_call.1} parent=1 // pred_check_branch
      %268 = sbr.rel (0) target = $region41
    $region40: #{tpu_custom_call.1} parent=1 // pred_region
      _
    $region41: #{tpu_custom_call.1} parent=1 // pred_fallthru
      _
    // Predicated region
    $region42: #{tpu_custom_call.1} parent=1 // pred_check
      _
    $region43: #{tpu_custom_call.1} parent=1 // pred_check_branch
      %270 = sbr.rel (0) target = $region45
    $region44: #{tpu_custom_call.1} parent=1 // pred_region
      _
    $region45: #{tpu_custom_call.1} parent=1 // pred_fallthru
      _
    // Predicated region
    $region46: #{tpu_custom_call.1} parent=1 // pred_check
      _
    $region47: #{tpu_custom_call.1} parent=1 // pred_check_branch
      %272 = sbr.rel (0) target = $region49
    $region48: #{tpu_custom_call.1} parent=1 // pred_region
      _
    $region49: #{tpu_custom_call.1} parent=1 // pred_fallthru
      _
    // Predicated region
    $region50: #{tpu_custom_call.1} parent=1 // pred_check
      _
    $region51: #{tpu_custom_call.1} parent=1 // pred_check_branch
      %274 = sbr.rel (0) target = $region53
    $region52: #{tpu_custom_call.1} parent=1 // pred_region
      _
    $region53: #{tpu_custom_call.1} parent=1 // pred_fallthru
      _
    %275 = vsyncpa [#allocation3], 1
    %276 = vsyncpa [#allocation5], 1

</llo_original>
